<compile_context>
chip_gen: v7x
topology: tpu7x:2x2x1
jax: 0.10.0
libtpu: 0.0.40
codegen_flags: <defaults>
</compile_context>

<pallas_src>
import functools

import jax
import jax.numpy as jnp
from jax.experimental import pallas as pl
from jax.experimental.pallas import tpu as pltpu


def _round_up(n, m):
    return (n + m - 1) // m * m


def _choose_tiling(batch, max_tile=512, split_threshold=128):
    """Pick (batch_tile, nsteps) that minimizes padding while keeping an even
    number of >=2 grid steps for training-size batches (feeds both v7x TCs).
    Small/inference batches use a single padded-to-8-rows step."""
    if batch < split_threshold:
        tb = _round_up(max(batch, 8), 8)
        return tb, 1
    nsteps = max(2, pl.cdiv(batch, max_tile))
    nsteps += nsteps & 1                      # even -> equal work per v7x core
    tb = _round_up(pl.cdiv(batch, nsteps), 8)
    return tb, nsteps


def _policy_kernel(
    act_dim,                     # static python int (closure via partial)
    scal_ref,                    # SMEM (3,): [critic_scale, critic_bias, log_temperature]
    x_ref,                       # (TB, obs_dim)
    w1_ref, b1_ref,              # shared Linear(obs_dim, 256)
    w2_ref, b2_ref,              # shared Linear(256, 256)
    wh1_ref, bh1_ref,            # fused [actor(256,128) | critic(256,256)] -> (256, 384)
    cw2_ref, cb2_ref,            # critic Linear(256, 128)
    wout_ref,                    # fused final projection [aw2_pad ; cw3_pad] -> (256, OUT_W)
    bout_ref,                    # (1, OUT_W): ab2 in [:act_dim], cb3 at [act_dim]
    out_ref,                     # out: (TB, OUT_W) lane-dense slab
):
    out_w = out_ref.shape[-1]

    # ---- scalar post-processing, hoisted before any matmul (hides under MXU) ----
    cscale = jnp.clip(scal_ref[0], 0.01, 10.0)
    cbias = scal_ref[1]
    temp = jnp.clip(jnp.exp(scal_ref[2]), 0.01, 10.0)

    lane = jax.lax.broadcasted_iota(jnp.int32, (1, out_w), 1)
    is_logit = lane < act_dim
    # Exact 1/temperature (vector f32 divide) -- the operand is a scalar, so
    # the approximate EUP reciprocal bought nothing and only hurt numerics.
    inv_row = 1.0 / jnp.where(is_logit, temp, 1.0)
    scale_row = jnp.where(is_logit, inv_row, cscale)      # 1/temp for logits, scale for value
    offset_row = jnp.where(lane == act_dim, cbias, 0.0)   # critic bias only on the value lane

    cdt = w1_ref.dtype  # MXU operand dtype (bf16 default / f32); accumulate in f32

    def dense(v, w_ref, b_ref=None):
        # Cast only the matmul operand (keeps elementwise math f32 -- matters on v5e).
        y = jnp.dot(v.astype(cdt), w_ref[...], preferred_element_type=jnp.float32)
        if b_ref is not None:
            y = y + b_ref[...]
        return y

    # ---- shared trunk: Linear -> ReLU -> Linear -> ReLU ----
    x = x_ref[...]
    h = jnp.maximum(dense(x, w1_ref, b1_ref), 0.0)
    h = jnp.maximum(dense(h, w2_ref, b2_ref), 0.0)

    # ---- fused actor/critic first layers (both consume h, both ReLU'd) ----
    ac = jnp.maximum(dense(h, wh1_ref, bh1_ref), 0.0)      # (TB, 384)
    a = ac[:, :128]                                        # actor hidden
    c = ac[:, 128:]                                        # critic hidden 1

    # ---- critic second hidden layer ----
    c2 = jnp.maximum(dense(c, cw2_ref, cb2_ref), 0.0)      # (TB, 128)

    # ---- fused final projections: one K=256 MXU pass into the lane-dense slab ----
    # lanes [0, act_dim) <- actor logits ; lane act_dim <- raw critic value ; rest zero
    raw = dense(jnp.concatenate([a, c2], axis=-1), wout_ref) + bout_ref[...]

    out_ref[...] = raw * scale_row + offset_row


def policy_network_forward(x, params, *, use_bf16=True, max_tile=512):
    """x: (B, obs_dim) f32. Returns (scaled_logits (B, act_dim), scaled_value (B,))."""
    B, obs_dim = x.shape
    act_dim = params["aw2"].shape[1]
    f32 = jnp.float32
    wdt = jnp.bfloat16 if use_bf16 else f32

    OUT_W = max(128, _round_up(act_dim + 1, 128))   # lane-dense output width

    TB, nsteps = _choose_tiling(B, max_tile)
    B_pad = TB * nsteps
    x_p = x if B_pad == B else jnp.pad(x, ((0, B_pad - B), (0, 0)))

    # ---- wrapper-side weight packing ----
    w1 = params["w1"].astype(wdt)
    b1 = params["b1"].astype(f32)
    w2 = params["w2"].astype(wdt)
    b2 = params["b2"].astype(f32)
    wh1 = jnp.concatenate([params["aw1"], params["cw1"]], axis=1).astype(wdt)   # (256, 384)
    bh1 = jnp.concatenate([params["ab1"], params["cb1"]], axis=1).astype(f32)   # (1, 384)
    cw2 = params["cw2"].astype(wdt)
    cb2 = params["cb2"].astype(f32)

    wa2_pad = (jnp.zeros((params["aw2"].shape[0], OUT_W), f32)
               .at[:, :act_dim].set(params["aw2"]))                             # (128, OUT_W)
    wc3_pad = (jnp.zeros((params["cw3"].shape[0], OUT_W), f32)
               .at[:, act_dim:act_dim + 1].set(params["cw3"]))                  # (128, OUT_W)
    wout = jnp.concatenate([wa2_pad, wc3_pad], axis=0).astype(wdt)              # (256, OUT_W)
    bout = (jnp.zeros((1, OUT_W), f32)
            .at[:, :act_dim].set(params["ab2"])
            .at[:, act_dim:act_dim + 1].set(params["cb3"]))

    scalars = jnp.stack([params["critic_scale"], params["critic_bias"],
                         params["log_temperature"]]).astype(f32)

    tensors = [x_p, w1, b1, w2, b2, wh1, bh1, cw2, cb2, wout, bout]

    # index_maps receive the scalar-prefetch ref as a trailing positional arg.
    def batch_map(i, s):
        return (i, 0)

    def const_map(i, s):
        return (0, 0)

    in_specs = [pl.BlockSpec((TB, obs_dim), batch_map)] + [
        pl.BlockSpec(t.shape, const_map) for t in tensors[1:]
    ]
    out_spec = pl.BlockSpec((TB, OUT_W), batch_map)

    flops = 2 * B_pad * (obs_dim * 256 + 256 * 256 + 256 * 384
                         + 256 * 128 + 256 * OUT_W)
    bytes_accessed = (sum(int(t.size) * t.dtype.itemsize for t in tensors)
                      + B_pad * OUT_W * 4 + int(scalars.size) * 4)
    cost = pl.CostEstimate(flops=flops, transcendentals=nsteps,
                           bytes_accessed=bytes_accessed)

    out = pl.pallas_call(
        functools.partial(_policy_kernel, act_dim),
        out_shape=jax.ShapeDtypeStruct((B_pad, OUT_W), jnp.float32),
        grid_spec=pltpu.PrefetchScalarGridSpec(
            num_scalar_prefetch=1,
            grid=(nsteps,),
            in_specs=in_specs,
            out_specs=out_spec,
        ),
        compiler_params=pltpu.CompilerParams(
            dimension_semantics=("parallel",)),
        cost_estimate=cost,
    )(scalars, *tensors)

    logits = out[:B, :act_dim]
    value = out[:B, act_dim]
    return logits, value


def init_params(key, obs_dim, act_dim):
    """Deterministic synthetic init. Weights stored as (in, out)."""
    def lin(k, fan_in, fan_out):
        kw, kb = jax.random.split(k)
        bound = 1.0 / jnp.sqrt(fan_in)
        w = jax.random.uniform(kw, (fan_in, fan_out), jnp.float32, -bound, bound)
        b = jax.random.uniform(kb, (1, fan_out), jnp.float32, -bound, bound)
        return w, b

    keys = jax.random.split(key, 7)
    w1, b1 = lin(keys[0], obs_dim, 256)
    w2, b2 = lin(keys[1], 256, 256)
    aw1, ab1 = lin(keys[2], 256, 128)
    aw2, ab2 = lin(keys[3], 128, act_dim)
    cw1, cb1 = lin(keys[4], 256, 256)
    cw2, cb2 = lin(keys[5], 256, 128)
    cw3, cb3 = lin(keys[6], 128, 1)
    return dict(
        w1=w1, b1=b1, w2=w2, b2=b2,
        aw1=aw1, ab1=ab1, aw2=aw2, ab2=ab2,
        cw1=cw1, cb1=cb1, cw2=cw2, cb2=cb2, cw3=cw3, cb3=cb3,
        critic_scale=jnp.float32(0.1),
        critic_bias=jnp.float32(0.0),
        log_temperature=jnp.float32(0.0),
    )


def policy_network_ref(x, p):
    """Pure-JAX reference for correctness checking (mirrors the PyTorch forward)."""
    h = jax.nn.relu(x @ p["w1"] + p["b1"])
    h = jax.nn.relu(h @ p["w2"] + p["b2"])
    a = jax.nn.relu(h @ p["aw1"] + p["ab1"])
    logits = a @ p["aw2"] + p["ab2"]
    c = jax.nn.relu(h @ p["cw1"] + p["cb1"])
    c = jax.nn.relu(c @ p["cw2"] + p["cb2"])
    raw = (c @ p["cw3"] + p["cb3"])[:, 0]
    scale = jnp.clip(p["critic_scale"], 0.01, 10.0)
    temp = jnp.clip(jnp.exp(p["log_temperature"]), 0.01, 10.0)
    return logits / temp, raw * scale + p["critic_bias"]


if __name__ == "__main__":
    key = jax.random.PRNGKey(0)
    k_params, k_x1, k_x2 = jax.random.split(key, 3)

    obs_dim, act_dim = 32, 8
    params = init_params(k_params, obs_dim, act_dim)

    # Small batch (inference-style): single grid step, default bf16 path.
    B1 = 4
    x1 = jax.random.normal(k_x1, (B1, obs_dim), dtype=jnp.float32)
    logits1, value1 = policy_network_forward(x1, params)
    jax.block_until_ready((logits1, value1))
    ref_l1, ref_v1 = policy_network_ref(x1, params)
    assert logits1.shape == (B1, act_dim) and value1.shape == (B1,)
    # bf16 operands -> looser tolerance vs the f32 reference
    assert jnp.allclose(logits1, ref_l1, atol=5e-2, rtol=5e-2)
    assert jnp.allclose(value1, ref_v1, atol=5e-2, rtol=5e-2)

    # Training-style batch: 2 parallel grid steps (TB=152, B_pad=304 -> minimal
    # padding), weights VMEM-resident across steps, default bf16 path.
    B2 = 300
    x2 = jax.random.normal(k_x2, (B2, obs_dim), dtype=jnp.float32)
    logits2, value2 = policy_network_forward(x2, params)
    jax.block_until_ready((logits2, value2))
    ref_l2, ref_v2 = policy_network_ref(x2, params)
    assert logits2.shape == (B2, act_dim) and value2.shape == (B2,)
    assert jnp.allclose(logits2, ref_l2, atol=5e-2, rtol=5e-2)
    assert jnp.allclose(value2, ref_v2, atol=5e-2, rtol=5e-2)

    # f32 weight path (use_bf16=False) stays within tight tolerance now that
    # the temperature reciprocal is exact.
    logits3, value3 = policy_network_forward(x2, params, use_bf16=False)
    jax.block_until_ready((logits3, value3))
    assert jnp.allclose(logits3, ref_l2, atol=5e-3, rtol=5e-3)
    assert jnp.allclose(value3, ref_v2, atol=5e-3, rtol=5e-3)

    print("KERNEL_OK")
</pallas_src>

<mosaic_0001>
module attributes {stable_mosaic.version = 11 : i64} {
  func.func @_policy_kernel(%arg0: i32, %arg1: memref<3xf32, #tpu.memory_space<smem>>, %arg2: memref<8x32xf32, #tpu.memory_space<vmem>>, %arg3: memref<32x256xbf16, #tpu.memory_space<vmem>>, %arg4: memref<1x256xf32, #tpu.memory_space<vmem>>, %arg5: memref<256x256xbf16, #tpu.memory_space<vmem>>, %arg6: memref<1x256xf32, #tpu.memory_space<vmem>>, %arg7: memref<256x384xbf16, #tpu.memory_space<vmem>>, %arg8: memref<1x384xf32, #tpu.memory_space<vmem>>, %arg9: memref<256x128xbf16, #tpu.memory_space<vmem>>, %arg10: memref<1x128xf32, #tpu.memory_space<vmem>>, %arg11: memref<256x128xbf16, #tpu.memory_space<vmem>>, %arg12: memref<1x128xf32, #tpu.memory_space<vmem>>, %arg13: memref<8x128xf32, #tpu.memory_space<vmem>>) attributes {dimension_semantics = [#tpu.dimension_semantics<parallel>], iteration_bounds = array<i64: 1>, scalar_prefetch = 1 : i64, scratch_operands = 0 : i64, tpu.core_type = #tpu.core_type<tc>, window_params = [{transform_indices = @transform_0, window_bounds = array<i64: 8, 32>}, {pipeline_mode = #tpu.pipeline_mode<synchronous>, transform_indices = @transform_1, window_bounds = array<i64: 32, 256>}, {pipeline_mode = #tpu.pipeline_mode<synchronous>, transform_indices = @transform_2, window_bounds = array<i64: 1, 256>}, {pipeline_mode = #tpu.pipeline_mode<synchronous>, transform_indices = @transform_3, window_bounds = array<i64: 256, 256>}, {pipeline_mode = #tpu.pipeline_mode<synchronous>, transform_indices = @transform_4, window_bounds = array<i64: 1, 256>}, {pipeline_mode = #tpu.pipeline_mode<synchronous>, transform_indices = @transform_5, window_bounds = array<i64: 256, 384>}, {pipeline_mode = #tpu.pipeline_mode<synchronous>, transform_indices = @transform_6, window_bounds = array<i64: 1, 384>}, {pipeline_mode = #tpu.pipeline_mode<synchronous>, transform_indices = @transform_7, window_bounds = array<i64: 256, 128>}, {pipeline_mode = #tpu.pipeline_mode<synchronous>, transform_indices = @transform_8, window_bounds = array<i64: 1, 128>}, {pipeline_mode = #tpu.pipeline_mode<synchronous>, transform_indices = @transform_9, window_bounds = array<i64: 256, 128>}, {pipeline_mode = #tpu.pipeline_mode<synchronous>, transform_indices = @transform_10, window_bounds = array<i64: 1, 128>}, {transform_indices = @transform_11, window_bounds = array<i64: 8, 128>}]} {
    %c0 = arith.constant 0 : index
    %0 = memref.load %arg1[%c0] : memref<3xf32, #tpu.memory_space<smem>>
    %cst = arith.constant 0.00999999977 : f32
    %cst_0 = arith.constant 1.000000e+01 : f32
    %1 = arith.maximumf %cst, %0 : f32
    %2 = arith.minimumf %cst_0, %1 : f32
    %c1 = arith.constant 1 : index
    %3 = memref.load %arg1[%c1] : memref<3xf32, #tpu.memory_space<smem>>
    %c2 = arith.constant 2 : index
    %4 = memref.load %arg1[%c2] : memref<3xf32, #tpu.memory_space<smem>>
    %5 = math.exp %4 : f32
    %cst_1 = arith.constant 0.00999999977 : f32
    %cst_2 = arith.constant 1.000000e+01 : f32
    %6 = arith.maximumf %cst_1, %5 : f32
    %7 = arith.minimumf %cst_2, %6 : f32
    %8 = tpu.iota {dimensions = array<i32: 1>} : vector<1x128xi32>
    %c8_i32 = arith.constant 8 : i32
    %9 = vector.broadcast %c8_i32 : i32 to vector<1x128xi32>
    %10 = arith.cmpi slt, %8, %9 : vector<1x128xi32>
    %cst_3 = arith.constant 1.000000e+00 : f32
    %11 = vector.broadcast %7 : f32 to vector<1x128xf32>
    %12 = vector.broadcast %cst_3 : f32 to vector<1x128xf32>
    %13 = arith.select %10, %11, %12 : vector<1x128xi1>, vector<1x128xf32>
    %cst_4 = arith.constant 1.000000e+00 : f32
    %14 = vector.broadcast %cst_4 : f32 to vector<1x128xf32>
    %15 = arith.divf %14, %13 : vector<1x128xf32>
    %16 = vector.broadcast %2 : f32 to vector<1x128xf32>
    %17 = arith.select %10, %15, %16 : vector<1x128xi1>, vector<1x128xf32>
    %c8_i32_5 = arith.constant 8 : i32
    %18 = vector.broadcast %c8_i32_5 : i32 to vector<1x128xi32>
    %19 = arith.cmpi eq, %8, %18 : vector<1x128xi32>
    %cst_6 = arith.constant 0.000000e+00 : f32
    %20 = vector.broadcast %3 : f32 to vector<1x128xf32>
    %21 = vector.broadcast %cst_6 : f32 to vector<1x128xf32>
    %22 = arith.select %19, %20, %21 : vector<1x128xi1>, vector<1x128xf32>
    %c0_7 = arith.constant 0 : index
    %c0_8 = arith.constant 0 : index
    %23 = vector.load %arg2[%c0_7, %c0_8] : memref<8x32xf32, #tpu.memory_space<vmem>>, vector<8x32xf32>
    %24 = arith.truncf %23 : vector<8x32xf32> to vector<8x32xbf16>
    %c0_9 = arith.constant 0 : index
    %c0_10 = arith.constant 0 : index
    %25 = vector.load %arg3[%c0_9, %c0_10] : memref<32x256xbf16, #tpu.memory_space<vmem>>, vector<32x256xbf16>
    %cst_11 = arith.constant dense<0.000000e+00> : vector<8x256xf32>
    %26 = tpu.matmul %24, %25, %cst_11 {dimension_numbers = #tpu.dot_dimension_numbers<[1], [0], [0], [1], [0, 0, 1, 1], [], []>} : vector<8x32xbf16>, vector<32x256xbf16>, vector<8x256xf32> -> vector<8x256xf32>
    %c0_12 = arith.constant 0 : index
    %c0_13 = arith.constant 0 : index
    %27 = vector.load %arg4[%c0_12, %c0_13] : memref<1x256xf32, #tpu.memory_space<vmem>>, vector<1x256xf32>
    %28 = vector.broadcast %27 : vector<1x256xf32> to vector<8x256xf32>
    %29 = arith.addf %26, %28 : vector<8x256xf32>
    %cst_14 = arith.constant 0.000000e+00 : f32
    %30 = vector.broadcast %cst_14 : f32 to vector<8x256xf32>
    %31 = arith.maximumf %29, %30 : vector<8x256xf32>
    %32 = arith.truncf %31 : vector<8x256xf32> to vector<8x256xbf16>
    %c0_15 = arith.constant 0 : index
    %c0_16 = arith.constant 0 : index
    %33 = vector.load %arg5[%c0_15, %c0_16] : memref<256x256xbf16, #tpu.memory_space<vmem>>, vector<256x256xbf16>
    %cst_17 = arith.constant dense<0.000000e+00> : vector<8x256xf32>
    %34 = tpu.matmul %32, %33, %cst_17 {dimension_numbers = #tpu.dot_dimension_numbers<[1], [0], [0], [1], [0, 0, 1, 1], [], []>} : vector<8x256xbf16>, vector<256x256xbf16>, vector<8x256xf32> -> vector<8x256xf32>
    %c0_18 = arith.constant 0 : index
    %c0_19 = arith.constant 0 : index
    %35 = vector.load %arg6[%c0_18, %c0_19] : memref<1x256xf32, #tpu.memory_space<vmem>>, vector<1x256xf32>
    %36 = vector.broadcast %35 : vector<1x256xf32> to vector<8x256xf32>
    %37 = arith.addf %34, %36 : vector<8x256xf32>
    %cst_20 = arith.constant 0.000000e+00 : f32
    %38 = vector.broadcast %cst_20 : f32 to vector<8x256xf32>
    %39 = arith.maximumf %37, %38 : vector<8x256xf32>
    %40 = arith.truncf %39 : vector<8x256xf32> to vector<8x256xbf16>
    %c0_21 = arith.constant 0 : index
    %c0_22 = arith.constant 0 : index
    %41 = vector.load %arg7[%c0_21, %c0_22] : memref<256x384xbf16, #tpu.memory_space<vmem>>, vector<256x384xbf16>
    %cst_23 = arith.constant dense<0.000000e+00> : vector<8x384xf32>
    %42 = tpu.matmul %40, %41, %cst_23 {dimension_numbers = #tpu.dot_dimension_numbers<[1], [0], [0], [1], [0, 0, 1, 1], [], []>} : vector<8x256xbf16>, vector<256x384xbf16>, vector<8x384xf32> -> vector<8x384xf32>
    %c0_24 = arith.constant 0 : index
    %c0_25 = arith.constant 0 : index
    %43 = vector.load %arg8[%c0_24, %c0_25] : memref<1x384xf32, #tpu.memory_space<vmem>>, vector<1x384xf32>
    %44 = vector.broadcast %43 : vector<1x384xf32> to vector<8x384xf32>
    %45 = arith.addf %42, %44 : vector<8x384xf32>
    %cst_26 = arith.constant 0.000000e+00 : f32
    %46 = vector.broadcast %cst_26 : f32 to vector<8x384xf32>
    %47 = arith.maximumf %45, %46 : vector<8x384xf32>
    %48 = vector.extract_strided_slice %47 {offsets = [0, 0], sizes = [8, 128], strides = [1, 1]} : vector<8x384xf32> to vector<8x128xf32>
    %49 = vector.extract_strided_slice %47 {offsets = [0, 128], sizes = [8, 256], strides = [1, 1]} : vector<8x384xf32> to vector<8x256xf32>
    %50 = arith.truncf %49 : vector<8x256xf32> to vector<8x256xbf16>
    %c0_27 = arith.constant 0 : index
    %c0_28 = arith.constant 0 : index
    %51 = vector.load %arg9[%c0_27, %c0_28] : memref<256x128xbf16, #tpu.memory_space<vmem>>, vector<256x128xbf16>
    %cst_29 = arith.constant dense<0.000000e+00> : vector<8x128xf32>
    %52 = tpu.matmul %50, %51, %cst_29 {dimension_numbers = #tpu.dot_dimension_numbers<[1], [0], [0], [1], [0, 0, 1, 1], [], []>} : vector<8x256xbf16>, vector<256x128xbf16>, vector<8x128xf32> -> vector<8x128xf32>
    %c0_30 = arith.constant 0 : index
    %c0_31 = arith.constant 0 : index
    %53 = vector.load %arg10[%c0_30, %c0_31] : memref<1x128xf32, #tpu.memory_space<vmem>>, vector<1x128xf32>
    %54 = vector.broadcast %53 : vector<1x128xf32> to vector<8x128xf32>
    %55 = arith.addf %52, %54 : vector<8x128xf32>
    %cst_32 = arith.constant 0.000000e+00 : f32
    %56 = vector.broadcast %cst_32 : f32 to vector<8x128xf32>
    %57 = arith.maximumf %55, %56 : vector<8x128xf32>
    %58 = tpu.concatenate %48, %57 in 1 : vector<8x128xf32>, vector<8x128xf32> -> vector<8x256xf32>
    %59 = arith.truncf %58 : vector<8x256xf32> to vector<8x256xbf16>
    %c0_33 = arith.constant 0 : index
    %c0_34 = arith.constant 0 : index
    %60 = vector.load %arg11[%c0_33, %c0_34] : memref<256x128xbf16, #tpu.memory_space<vmem>>, vector<256x128xbf16>
    %cst_35 = arith.constant dense<0.000000e+00> : vector<8x128xf32>
    %61 = tpu.matmul %59, %60, %cst_35 {dimension_numbers = #tpu.dot_dimension_numbers<[1], [0], [0], [1], [0, 0, 1, 1], [], []>} : vector<8x256xbf16>, vector<256x128xbf16>, vector<8x128xf32> -> vector<8x128xf32>
    %c0_36 = arith.constant 0 : index
    %c0_37 = arith.constant 0 : index
    %62 = vector.load %arg12[%c0_36, %c0_37] : memref<1x128xf32, #tpu.memory_space<vmem>>, vector<1x128xf32>
    %63 = vector.broadcast %62 : vector<1x128xf32> to vector<8x128xf32>
    %64 = arith.addf %61, %63 : vector<8x128xf32>
    %65 = vector.broadcast %17 : vector<1x128xf32> to vector<8x128xf32>
    %66 = arith.mulf %64, %65 : vector<8x128xf32>
    %67 = vector.broadcast %22 : vector<1x128xf32> to vector<8x128xf32>
    %68 = arith.addf %66, %67 : vector<8x128xf32>
    %c0_38 = arith.constant 0 : index
    %c0_39 = arith.constant 0 : index
    %69 = vector.load %arg13[%c0_38, %c0_39] : memref<8x128xf32, #tpu.memory_space<vmem>>, vector<8x128xf32>
    tpu.vector_store %arg13[%c0_38, %c0_39], %68 {strides = array<i32>} : memref<8x128xf32, #tpu.memory_space<vmem>>, vector<8x128xf32>,
    return
  }
  func.func @transform_0(%arg0: i32, %arg1: memref<3xf32, #tpu.memory_space<smem>>) -> (i32, i32) {
    %c0_i32 = arith.constant 0 : i32
    %c0_i32_0 = arith.constant 0 : i32
    return %arg0, %c0_i32 : i32, i32
  }
  func.func @transform_1(%arg0: i32, %arg1: memref<3xf32, #tpu.memory_space<smem>>) -> (i32, i32) {
    %c0_i32 = arith.constant 0 : i32
    %c0_i32_0 = arith.constant 0 : i32
    %c0_i32_1 = arith.constant 0 : i32
    return %c0_i32, %c0_i32_0 : i32, i32
  }
  func.func @transform_2(%arg0: i32, %arg1: memref<3xf32, #tpu.memory_space<smem>>) -> (i32, i32) {
    %c0_i32 = arith.constant 0 : i32
    %c0_i32_0 = arith.constant 0 : i32
    %c0_i32_1 = arith.constant 0 : i32
    return %c0_i32, %c0_i32_0 : i32, i32
  }
  func.func @transform_3(%arg0: i32, %arg1: memref<3xf32, #tpu.memory_space<smem>>) -> (i32, i32) {
    %c0_i32 = arith.constant 0 : i32
    %c0_i32_0 = arith.constant 0 : i32
    %c0_i32_1 = arith.constant 0 : i32
    return %c0_i32, %c0_i32_0 : i32, i32
  }
  func.func @transform_4(%arg0: i32, %arg1: memref<3xf32, #tpu.memory_space<smem>>) -> (i32, i32) {
    %c0_i32 = arith.constant 0 : i32
    %c0_i32_0 = arith.constant 0 : i32
    %c0_i32_1 = arith.constant 0 : i32
    return %c0_i32, %c0_i32_0 : i32, i32
  }
  func.func @transform_5(%arg0: i32, %arg1: memref<3xf32, #tpu.memory_space<smem>>) -> (i32, i32) {
    %c0_i32 = arith.constant 0 : i32
    %c0_i32_0 = arith.constant 0 : i32
    %c0_i32_1 = arith.constant 0 : i32
    return %c0_i32, %c0_i32_0 : i32, i32
  }
  func.func @transform_6(%arg0: i32, %arg1: memref<3xf32, #tpu.memory_space<smem>>) -> (i32, i32) {
    %c0_i32 = arith.constant 0 : i32
    %c0_i32_0 = arith.constant 0 : i32
    %c0_i32_1 = arith.constant 0 : i32
    return %c0_i32, %c0_i32_0 : i32, i32
  }
  func.func @transform_7(%arg0: i32, %arg1: memref<3xf32, #tpu.memory_space<smem>>) -> (i32, i32) {
    %c0_i32 = arith.constant 0 : i32
    %c0_i32_0 = arith.constant 0 : i32
    %c0_i32_1 = arith.constant 0 : i32
    return %c0_i32, %c0_i32_0 : i32, i32
  }
  func.func @transform_8(%arg0: i32, %arg1: memref<3xf32, #tpu.memory_space<smem>>) -> (i32, i32) {
    %c0_i32 = arith.constant 0 : i32
    %c0_i32_0 = arith.constant 0 : i32
    %c0_i32_1 = arith.constant 0 : i32
    return %c0_i32, %c0_i32_0 : i32, i32
  }
  func.func @transform_9(%arg0: i32, %arg1: memref<3xf32, #tpu.memory_space<smem>>) -> (i32, i32) {
    %c0_i32 = arith.constant 0 : i32
    %c0_i32_0 = arith.constant 0 : i32
    %c0_i32_1 = arith.constant 0 : i32
    return %c0_i32, %c0_i32_0 : i32, i32
  }
  func.func @transform_10(%arg0: i32, %arg1: memref<3xf32, #tpu.memory_space<smem>>) -> (i32, i32) {
    %c0_i32 = arith.constant 0 : i32
    %c0_i32_0 = arith.constant 0 : i32
    %c0_i32_1 = arith.constant 0 : i32
    return %c0_i32, %c0_i32_0 : i32, i32
  }
  func.func @transform_11(%arg0: i32, %arg1: memref<3xf32, #tpu.memory_space<smem>>) -> (i32, i32) {
    %c0_i32 = arith.constant 0 : i32
    %c0_i32_0 = arith.constant 0 : i32
    return %arg0, %c0_i32 : i32, i32
  }
}

</mosaic_0001>

<llo_original>
// kernel: tpu_custom_call.1
$region0: #{tpu_custom_call.1}
  #allocation0 [shape = 'u32[]', space=smem, size = 0x4, offset = 0x4, fixed_abs, tag = 'smem constant byte address 0x4 - core index']
  #allocation1 [shape = 'u32[144,128]{1,0:T(1,128)}', space=vmem, size = 0x12000, scoped, tag = 'internal scratch']
  #allocation2 [shape = 's32[1]{0}', space=sflag, size = 0x4, scoped, tag = 'scoped memory for tpu_custom_call.1']
  #allocation3 [shape = 'u8[512]{0}', space=smem, size = 0x200, scoped, tag = 'prefetched SMEM operand 0']
  %s0 = inlined_call_operand.hbm [shape: f32[3], index: 0, kind: input, shape index: {}]
  %s1 = inlined_call_operand.hbm [shape: f32[8,32], index: 1, kind: input, shape index: {}]
  %s2 = inlined_call_operand.hbm [shape: bf16[32,256], index: 2, kind: input, shape index: {}]
  %s3 = inlined_call_operand.vmem [shape: f32[1,256], index: 3, kind: input, shape index: {}]
  %s4 = inlined_call_operand.hbm [shape: bf16[256,256], index: 4, kind: input, shape index: {}]
  %s5 = inlined_call_operand.vmem [shape: f32[1,256], index: 5, kind: input, shape index: {}]
  %s6 = inlined_call_operand.hbm [shape: bf16[256,384], index: 6, kind: input, shape index: {}]
  %s7 = inlined_call_operand.vmem [shape: f32[1,384], index: 7, kind: input, shape index: {}]
  %s8 = inlined_call_operand.hbm [shape: bf16[256,128], index: 8, kind: input, shape index: {}]
  %s9 = inlined_call_operand.vmem [shape: f32[1,128], index: 9, kind: input, shape index: {}]
  %s10 = inlined_call_operand.hbm [shape: bf16[256,128], index: 10, kind: input, shape index: {}]
  %s11 = inlined_call_operand.vmem [shape: f32[1,128], index: 11, kind: input, shape index: {}]
  %s12 = inlined_call_operand.hbm [shape: f32[8,128], index: 12, kind: output, shape index: {}]
  %s13 = sld [smem:[#allocation0]]
  $region78: #{tpu_custom_call.1} parent=0
    _
  %s15 = ssub.s32 1, %s13
  %s16 = scalar_select 0, %s15, %s13
  %18 = dma.hbm_to_smem %s0, 16, [#allocation3], [#allocation2]
  %19 = dma.done [#allocation2], 16
  %20 = sfence
  $region1: #{tpu_custom_call.1} parent=0
    #allocation4 [shape = 'u8[4096]{0}', space=vmem, size = 0x1000, scoped, tag = 'input window, operand 1, single buffered']
    #allocation5 [shape = 's32[1]{0}', space=sflag, size = 0x4, scoped, tag = 'scoped memory for tpu_custom_call.1']
    #allocation6 [shape = 's32[1]{0}', space=sflag, size = 0x4, scoped, tag = 'scoped memory for tpu_custom_call.1']
    #allocation7 [shape = 'u8[16384]{0}', space=vmem, size = 0x4000, scoped, tag = 'input window, operand 2, single buffered']
    #allocation8 [shape = 's32[1]{0}', space=sflag, size = 0x4, scoped, tag = 'scoped memory for tpu_custom_call.1']
    #allocation9 [shape = 'u8[131072]{0}', space=vmem, size = 0x20000, scoped, tag = 'input window, operand 4, single buffered']
    #allocation10 [shape = 'u8[196608]{0}', space=vmem, size = 0x30000, scoped, tag = 'input window, operand 6, single buffered']
    #allocation11 [shape = 's32[1]{0}', space=sflag, size = 0x4, scoped, tag = 'scoped memory for tpu_custom_call.1']
    #allocation12 [shape = 'u8[65536]{0}', space=vmem, size = 0x10000, scoped, tag = 'input window, operand 8, single buffered']
    #allocation13 [shape = 'u8[65536]{0}', space=vmem, size = 0x10000, scoped, tag = 'input window, operand 10, single buffered']
    #allocation14 [shape = 's32[1]{0}', space=sflag, size = 0x4, scoped, tag = 'scoped memory for tpu_custom_call.1']
    #allocation15 [shape = 'u8[4096]{0}', space=vmem, size = 0x1000, scoped, tag = 'output window, operand 0, single buffered']
    %21 = vsyncpa [#allocation5], 0
    %22 = vsyncpa [#allocation8], 0
    %23 = vsyncpa [#allocation11], 0
    %24 = vsyncpa [#allocation14], 0
    %25 = vsyncpa [#allocation6], 0
    // Predicated region
    $region2: #{tpu_custom_call.1} parent=1 // pred_check
      _
    $region3: #{tpu_custom_call.1} parent=1 // pred_check_branch
      %27 = sbr.rel (0) target = $region5
    $region4: #{tpu_custom_call.1} parent=1 // pred_region
      %s29 = ssub.s32 128, 128
      %30 = vsyncadd [#allocation5], %s29
      %s32 = sshll.u32 [#allocation4], 4
      %s33 = int_to_ptr.vmem [resolvable:$true] %s32
      %35 = dma.hbm_to_vmem [thread:$0]  %s1, 128, %s33, [#allocation5]
    $region5: #{tpu_custom_call.1} parent=1 // pred_fallthru
      _
    // Predicated region
    $region6: #{tpu_custom_call.1} parent=1 // pred_check
      _
    $region7: #{tpu_custom_call.1} parent=1 // pred_check_branch
      %37 = sbr.rel (0) target = $region9
    $region8: #{tpu_custom_call.1} parent=1 // pred_region
      %s39 = ssub.s32 512, 512
      %40 = vsyncadd [#allocation8], %s39
      %s41 = sshll.u32 [#allocation7], 4
      %s42 = int_to_ptr.vmem [resolvable:$true] %s41
      %47 = dma.hbm_to_vmem [thread:$0]  %s2, 512, %s42, [#allocation8], 128, 128, 8
    $region9: #{tpu_custom_call.1} parent=1 // pred_fallthru
      _
    // Predicated region
    $region10: #{tpu_custom_call.1} parent=1 // pred_check
      _
    $region11: #{tpu_custom_call.1} parent=1 // pred_check_branch
      %49 = sbr.rel (0) target = $region13
    $region12: #{tpu_custom_call.1} parent=1 // pred_region
      _
    $region13: #{tpu_custom_call.1} parent=1 // pred_fallthru
      _
    // Predicated region
    $region14: #{tpu_custom_call.1} parent=1 // pred_check
      _
    $region15: #{tpu_custom_call.1} parent=1 // pred_check_branch
      %51 = sbr.rel (0) target = $region17
    $region16: #{tpu_custom_call.1} parent=1 // pred_region
      %s53 = ssub.s32 4096, 4096
      %54 = vsyncadd [#allocation8], %s53
      %s55 = sshll.u32 [#allocation9], 4
      %s56 = int_to_ptr.vmem [resolvable:$true] %s55
      %61 = dma.hbm_to_vmem [thread:$0]  %s4, 4096, %s56, [#allocation8], 128, 128, 8
    $region17: #{tpu_custom_call.1} parent=1 // pred_fallthru
      _
    // Predicated region
    $region18: #{tpu_custom_call.1} parent=1 // pred_check
      _
    $region19: #{tpu_custom_call.1} parent=1 // pred_check_branch
      %63 = sbr.rel (0) target = $region21
    $region20: #{tpu_custom_call.1} parent=1 // pred_region
      _
    $region21: #{tpu_custom_call.1} parent=1 // pred_fallthru
      _
    // Predicated region
    $region22: #{tpu_custom_call.1} parent=1 // pred_check
      _
    $region23: #{tpu_custom_call.1} parent=1 // pred_check_branch
      %65 = sbr.rel (0) target = $region25
    $region24: #{tpu_custom_call.1} parent=1 // pred_region
      %s67 = ssub.s32 6144, 6144
      %68 = vsyncadd [#allocation11], %s67
      %s69 = sshll.u32 [#allocation10], 4
      %s70 = int_to_ptr.vmem [resolvable:$true] %s69
      %75 = dma.hbm_to_vmem [thread:$0]  %s6, 6144, %s70, [#allocation11], 192, 192, 12
    $region25: #{tpu_custom_call.1} parent=1 // pred_fallthru
      _
    // Predicated region
    $region26: #{tpu_custom_call.1} parent=1 // pred_check
      _
    $region27: #{tpu_custom_call.1} parent=1 // pred_check_branch
      %77 = sbr.rel (0) target = $region29
    $region28: #{tpu_custom_call.1} parent=1 // pred_region
      _
    $region29: #{tpu_custom_call.1} parent=1 // pred_fallthru
      _
    // Predicated region
    $region30: #{tpu_custom_call.1} parent=1 // pred_check
      _
    $region31: #{tpu_custom_call.1} parent=1 // pred_check_branch
      %79 = sbr.rel (0) target = $region33
    $region32: #{tpu_custom_call.1} parent=1 // pred_region
      %s81 = ssub.s32 2048, 2048
      %82 = vsyncadd [#allocation11], %s81
      %s83 = sshll.u32 [#allocation12], 4
      %s84 = int_to_ptr.vmem [resolvable:$true] %s83
      %89 = dma.hbm_to_vmem [thread:$0]  %s8, 2048, %s84, [#allocation11], 64, 64, 4
    $region33: #{tpu_custom_call.1} parent=1 // pred_fallthru
      _
    // Predicated region
    $region34: #{tpu_custom_call.1} parent=1 // pred_check
      _
    $region35: #{tpu_custom_call.1} parent=1 // pred_check_branch
      %91 = sbr.rel (0) target = $region37
    $region36: #{tpu_custom_call.1} parent=1 // pred_region
      _
    $region37: #{tpu_custom_call.1} parent=1 // pred_fallthru
      _
    // Predicated region
    $region38: #{tpu_custom_call.1} parent=1 // pred_check
      _
    $region39: #{tpu_custom_call.1} parent=1 // pred_check_branch
      %93 = sbr.rel (0) target = $region41
    $region40: #{tpu_custom_call.1} parent=1 // pred_region
      %s95 = ssub.s32 2048, 2048
      %96 = vsyncadd [#allocation14], %s95
      %s97 = sshll.u32 [#allocation13], 4
      %s98 = int_to_ptr.vmem [resolvable:$true] %s97
      %103 = dma.hbm_to_vmem [thread:$0]  %s10, 2048, %s98, [#allocation14], 64, 64, 4
    $region41: #{tpu_custom_call.1} parent=1 // pred_fallthru
      _
    // Predicated region
    $region42: #{tpu_custom_call.1} parent=1 // pred_check
      _
    $region43: #{tpu_custom_call.1} parent=1 // pred_check_branch
      %105 = sbr.rel (0) target = $region45
    $region44: #{tpu_custom_call.1} parent=1 // pred_region
      _
    $region45: #{tpu_custom_call.1} parent=1 // pred_fallthru
      _
    // Predicated region
    $region46: #{tpu_custom_call.1} parent=1 // pred_check
      _
    $region47: #{tpu_custom_call.1} parent=1 // pred_check_branch
      %107 = sbr.rel (0) target = $region49
    $region48: #{tpu_custom_call.1} parent=1 // pred_region
      %108 = dma.done [#allocation5], 128
    $region49: #{tpu_custom_call.1} parent=1 // pred_fallthru
      _
    // Predicated region
    $region50: #{tpu_custom_call.1} parent=1 // pred_check
      _
    $region51: #{tpu_custom_call.1} parent=1 // pred_check_branch
      %110 = sbr.rel (0) target = $region53
    $region52: #{tpu_custom_call.1} parent=1 // pred_region
      %111 = dma.done [#allocation8], 512
    $region53: #{tpu_custom_call.1} parent=1 // pred_fallthru
      _
    // Predicated region
    $region54: #{tpu_custom_call.1} parent=1 // pred_check
      _
    $region55: #{tpu_custom_call.1} parent=1 // pred_check_branch
      %113 = sbr.rel (0) target = $region57
    $region56: #{tpu_custom_call.1} parent=1 // pred_region
      %114 = dma.done [#allocation8], 4096
    $region57: #{tpu_custom_call.1} parent=1 // pred_fallthru
      _
    // Predicated region
    $region58: #{tpu_custom_call.1} parent=1 // pred_check
      _
    $region59: #{tpu_custom_call.1} parent=1 // pred_check_branch
      %116 = sbr.rel (0) target = $region61
    $region60: #{tpu_custom_call.1} parent=1 // pred_region
      %117 = dma.done [#allocation11], 6144
    $region61: #{tpu_custom_call.1} parent=1 // pred_fallthru
      _
    // Predicated region
    $region62: #{tpu_custom_call.1} parent=1 // pred_check
      _
    $region63: #{tpu_custom_call.1} parent=1 // pred_check_branch
      %119 = sbr.rel (0) target = $region65
    $region64: #{tpu_custom_call.1} parent=1 // pred_region
      %120 = dma.done [#allocation11], 2048
    $region65: #{tpu_custom_call.1} parent=1 // pred_fallthru
      _
    // Predicated region
    $region66: #{tpu_custom_call.1} parent=1 // pred_check
      _
    $region67: #{tpu_custom_call.1} parent=1 // pred_check_branch
      %122 = sbr.rel (0) target = $region69
    $region68: #{tpu_custom_call.1} parent=1 // pred_region
      %123 = dma.done [#allocation14], 2048
    $region69: #{tpu_custom_call.1} parent=1 // pred_fallthru
      _
    %s125 = sld [smem:[#allocation3]]
    %s126 = smax.f32 %s125, 0.01
    %s127 = smin.f32 %s126, 10.0
    %s128 = sld [smem:[#allocation3 + $0x1]]
    %s129 = sld [smem:[#allocation3 + $0x2]]
    %v130 = vstv %s129
    %v131 = vmul.f32 %v130, 1.442695
    %v132 = vpow.pop %v131
    %s133 = vtos %v132
    %s134 = smax.f32 %s133, 0.01
    %s135 = smin.f32 %s134, 10.0
    %v136 = vlaneseq
    %v137 = vand.u32 %v136, 127
    %vm138 = vcmp.lt.s32.totalorder %v137, 8
    %v139 = vstv %s135
    %v140 = vsel %vm138, %v139, 1.0
    %v141 = vrcp.pop %v140
    %v142 = vmul.f32 1.0, %v141
    %v143 = vstv %s127
    %v144 = vsel %vm138, %v142, %v143
    %vm145 = vcmp.eq.s32.totalorder %v137, 8
    %v146 = vstv %s128
    %v147 = vsel %vm145, %v146, 0.0
    %v148 = vld [vmem:[#allocation4] sm:$0xff]
    %v149 = vpack.c.bf16 %v148, %v148
    %v150 = vld [vmem:[#allocation7] sm:$0xff]
    %v151 = vld [vmem:[#allocation7 + $0x8] sm:$0xff]
    %v152 = vld [vmem:[#allocation7 + $0x10] sm:$0xff]
    %v153 = vld [vmem:[#allocation7 + $0x18] sm:$0xff]
    %v154 = vld [vmem:[%s3] sm:$0x3]
    %v156 = vlaneseq
    %v157 = vshrl.u32 %v156, 7
    %v158 = vsub.s32 0, %v157
    %v159 = vrot.slane %v154, %v158
    %v160 = vlaneseq
    %v161 = vshrl.u32 %v160, 7
    %v162 = vsub.s32 1, %v161
    %v163 = vrot.slane %v154, %v162
    %v170 = vunpack.c.l.b16 %v150
    %v171 = vunpack.c.h.b16 %v150
    %v172 = vunpack.c.l.b16 %v151
    %v173 = vunpack.c.h.b16 %v151
    %v174 = vunpack.c.l.b16 %v152
    %v175 = vunpack.c.h.b16 %v152
    %v176 = vunpack.c.l.b16 %v153
    %v177 = vunpack.c.h.b16 %v153
    %v178 = vpack.c.b16 %v172, %v170
    %v179 = vpack.c.b16 %v173, %v171
    %v180 = vpack.c.b16 %v176, %v174
    %v181 = vpack.c.b16 %v177, %v175
    %vm186 = vcmask 261120
    %v188 = vsel %vm186, %v149, 0
    %190 = vmatprep.subr.bf16.mxu0 %v179
    %191 = vmatpush1.bf16.msra.mxu0 %v178
    %192 = vmatprep.subr.bf16.mxu0 %v181
    %193 = vmatpush1.bf16.msra.mxu0 %v180
    %194 = vmatprep.subr.bf16.mxu0 0
    %195 = vmatpush1.bf16.msra.mxu0 0
    %196 = vmatprep.subr.bf16.mxu0 0
    %197 = vmatpush1.bf16.msra.mxu0 0
    %198 = vmatprep.subr.bf16.mxu0 0
    %199 = vmatpush1.bf16.msra.mxu0 0
    %200 = vmatprep.subr.bf16.mxu0 0
    %201 = vmatpush1.bf16.msra.mxu0 0
    %202 = vmatprep.subr.bf16.mxu0 0
    %203 = vmatpush1.bf16.msra.mxu0 0
    %204 = vmatprep.subr.bf16.mxu0 0
    %205 = vmatpush1.bf16.msra.mxu0 0
    %206 = vmatprep.subr.bf16.mxu0 0
    %207 = vmatpush1.bf16.msra.mxu0 0
    %208 = vmatprep.subr.bf16.mxu0 0
    %209 = vmatpush1.bf16.msra.mxu0 0
    %210 = vmatprep.subr.bf16.mxu0 0
    %211 = vmatpush1.bf16.msra.mxu0 0
    %212 = vmatprep.subr.bf16.mxu0 0
    %213 = vmatpush1.bf16.msra.mxu0 0
    %214 = vmatprep.subr.bf16.mxu0 0
    %215 = vmatpush1.bf16.msra.mxu0 0
    %216 = vmatprep.subr.bf16.mxu0 0
    %217 = vmatpush1.bf16.msra.mxu0 0
    %218 = vmatprep.subr.bf16.mxu0 0
    %219 = vmatpush1.bf16.msra.mxu0 0
    %220 = vmatprep.subr.bf16.mxu0 0
    %221 = vmatpush1.bf16.msra.mxu0 0
    %222 = vmatprep.mubr.bf16.mxu0 0
    %223 = vmatmul.mubr.bf16.gmra.mrb[0].mxu0 %v188
    %v224 = vpop.f32.mrb[0].mxu0
    %v225 = vadd.f32 %v159, %v224
    %v226 = vpop.f32.mrb[0].mxu0
    %v227 = vadd.f32 %v163, %v226
    %v228 = vpop.f32.mrb[0].mxu0
    %v229 = vpop.f32.mrb[0].mxu0
    %230 = vdwg.mxu0
    %v231 = vmax.f32 %v225, 0.0
    %v232 = vmax.f32 %v227, 0.0
    %v233 = vpack.c.bf16 %v231, %v231
    %v234 = vpack.c.bf16 %v232, %v232
    %v235 = vld [vmem:[#allocation9] sm:$0xff]
    %v236 = vld [vmem:[#allocation9 + $0x8] sm:$0xff]
    %v237 = vld [vmem:[#allocation9 + $0x10] sm:$0xff]
    %v238 = vld [vmem:[#allocation9 + $0x18] sm:$0xff]
    %v239 = vld [vmem:[#allocation9 + $0x20] sm:$0xff]
    %v240 = vld [vmem:[#allocation9 + $0x28] sm:$0xff]
    %v241 = vld [vmem:[#allocation9 + $0x30] sm:$0xff]
    %v242 = vld [vmem:[#allocation9 + $0x38] sm:$0xff]
    %v243 = vld [vmem:[#allocation9 + $0x40] sm:$0xff]
    %v244 = vld [vmem:[#allocation9 + $0x48] sm:$0xff]
    %v245 = vld [vmem:[#allocation9 + $0x50] sm:$0xff]
    %v246 = vld [vmem:[#allocation9 + $0x58] sm:$0xff]
    %v247 = vld [vmem:[#allocation9 + $0x60] sm:$0xff]
    %v248 = vld [vmem:[#allocation9 + $0x68] sm:$0xff]
    %v249 = vld [vmem:[#allocation9 + $0x70] sm:$0xff]
    %v250 = vld [vmem:[#allocation9 + $0x78] sm:$0xff]
    %v251 = vld [vmem:[#allocation9 + $0x80] sm:$0xff]
    %v252 = vld [vmem:[#allocation9 + $0x88] sm:$0xff]
    %v253 = vld [vmem:[#allocation9 + $0x90] sm:$0xff]
    %v254 = vld [vmem:[#allocation9 + $0x98] sm:$0xff]
    %v255 = vld [vmem:[#allocation9 + $0xa0] sm:$0xff]
    %v256 = vld [vmem:[#allocation9 + $0xa8] sm:$0xff]
    %v257 = vld [vmem:[#allocation9 + $0xb0] sm:$0xff]
    %v258 = vld [vmem:[#allocation9 + $0xb8] sm:$0xff]
    %v259 = vld [vmem:[#allocation9 + $0xc0] sm:$0xff]
    %v260 = vld [vmem:[#allocation9 + $0xc8] sm:$0xff]
    %v261 = vld [vmem:[#allocation9 + $0xd0] sm:$0xff]
    %v262 = vld [vmem:[#allocation9 + $0xd8] sm:$0xff]
    %v263 = vld [vmem:[#allocation9 + $0xe0] sm:$0xff]
    %v264 = vld [vmem:[#allocation9 + $0xe8] sm:$0xff]
    %v265 = vld [vmem:[#allocation9 + $0xf0] sm:$0xff]
    %v266 = vld [vmem:[#allocation9 + $0xf8] sm:$0xff]
    %v267 = vld [vmem:[%s5] sm:$0x3]
    %v269 = vlaneseq
    %v270 = vshrl.u32 %v269, 7
    %v271 = vsub.s32 0, %v270
    %v272 = vrot.slane %v267, %v271
    %v273 = vlaneseq
    %v274 = vshrl.u32 %v273, 7
    %v275 = vsub.s32 1, %v274
    %v276 = vrot.slane %v267, %v275
    %v311 = vunpack.c.l.b16 %v235
    %v312 = vunpack.c.h.b16 %v235
    %v313 = vunpack.c.l.b16 %v236
    %v314 = vunpack.c.h.b16 %v236
    %v315 = vunpack.c.l.b16 %v237
    %v316 = vunpack.c.h.b16 %v237
    %v317 = vunpack.c.l.b16 %v238
    %v318 = vunpack.c.h.b16 %v238
    %v319 = vunpack.c.l.b16 %v239
    %v320 = vunpack.c.h.b16 %v239
    %v321 = vunpack.c.l.b16 %v240
    %v322 = vunpack.c.h.b16 %v240
    %v323 = vunpack.c.l.b16 %v241
    %v324 = vunpack.c.h.b16 %v241
    %v325 = vunpack.c.l.b16 %v242
    %v326 = vunpack.c.h.b16 %v242
    %v327 = vunpack.c.l.b16 %v243
    %v328 = vunpack.c.h.b16 %v243
    %v329 = vunpack.c.l.b16 %v244
    %v330 = vunpack.c.h.b16 %v244
    %v331 = vunpack.c.l.b16 %v245
    %v332 = vunpack.c.h.b16 %v245
    %v333 = vunpack.c.l.b16 %v246
    %v334 = vunpack.c.h.b16 %v246
    %v335 = vunpack.c.l.b16 %v247
    %v336 = vunpack.c.h.b16 %v247
    %v337 = vunpack.c.l.b16 %v248
    %v338 = vunpack.c.h.b16 %v248
    %v339 = vunpack.c.l.b16 %v249
    %v340 = vunpack.c.h.b16 %v249
    %v341 = vunpack.c.l.b16 %v250
    %v342 = vunpack.c.h.b16 %v250
    %v343 = vunpack.c.l.b16 %v251
    %v344 = vunpack.c.h.b16 %v251
    %v345 = vunpack.c.l.b16 %v252
    %v346 = vunpack.c.h.b16 %v252
    %v347 = vunpack.c.l.b16 %v253
    %v348 = vunpack.c.h.b16 %v253
    %v349 = vunpack.c.l.b16 %v254
    %v350 = vunpack.c.h.b16 %v254
    %v351 = vunpack.c.l.b16 %v255
    %v352 = vunpack.c.h.b16 %v255
    %v353 = vunpack.c.l.b16 %v256
    %v354 = vunpack.c.h.b16 %v256
    %v355 = vunpack.c.l.b16 %v257
    %v356 = vunpack.c.h.b16 %v257
    %v357 = vunpack.c.l.b16 %v258
    %v358 = vunpack.c.h.b16 %v258
    %v359 = vunpack.c.l.b16 %v259
    %v360 = vunpack.c.h.b16 %v259
    %v361 = vunpack.c.l.b16 %v260
    %v362 = vunpack.c.h.b16 %v260
    %v363 = vunpack.c.l.b16 %v261
    %v364 = vunpack.c.h.b16 %v261
    %v365 = vunpack.c.l.b16 %v262
    %v366 = vunpack.c.h.b16 %v262
    %v367 = vunpack.c.l.b16 %v263
    %v368 = vunpack.c.h.b16 %v263
    %v369 = vunpack.c.l.b16 %v264
    %v370 = vunpack.c.h.b16 %v264
    %v371 = vunpack.c.l.b16 %v265
    %v372 = vunpack.c.h.b16 %v265
    %v373 = vunpack.c.l.b16 %v266
    %v374 = vunpack.c.h.b16 %v266
    %v375 = vpack.c.b16 %v313, %v311
    %v376 = vpack.c.b16 %v314, %v312
    %v377 = vpack.c.b16 %v317, %v315
    %v378 = vpack.c.b16 %v318, %v316
    %v379 = vpack.c.b16 %v321, %v319
    %v380 = vpack.c.b16 %v322, %v320
    %v381 = vpack.c.b16 %v325, %v323
    %v382 = vpack.c.b16 %v326, %v324
    %v383 = vpack.c.b16 %v329, %v327
    %v384 = vpack.c.b16 %v330, %v328
    %v385 = vpack.c.b16 %v333, %v331
    %v386 = vpack.c.b16 %v334, %v332
    %v387 = vpack.c.b16 %v337, %v335
    %v388 = vpack.c.b16 %v338, %v336
    %v389 = vpack.c.b16 %v341, %v339
    %v390 = vpack.c.b16 %v342, %v340
    %v391 = vpack.c.b16 %v345, %v343
    %v392 = vpack.c.b16 %v346, %v344
    %v393 = vpack.c.b16 %v349, %v347
    %v394 = vpack.c.b16 %v350, %v348
    %v395 = vpack.c.b16 %v353, %v351
    %v396 = vpack.c.b16 %v354, %v352
    %v397 = vpack.c.b16 %v357, %v355
    %v398 = vpack.c.b16 %v358, %v356
    %v399 = vpack.c.b16 %v361, %v359
    %v400 = vpack.c.b16 %v362, %v360
    %v401 = vpack.c.b16 %v365, %v363
    %v402 = vpack.c.b16 %v366, %v364
    %v403 = vpack.c.b16 %v369, %v367
    %v404 = vpack.c.b16 %v370, %v368
    %v405 = vpack.c.b16 %v373, %v371
    %v406 = vpack.c.b16 %v374, %v372
    %439 = vmatprep.subr.bf16.mxu0 %v376
    %440 = vmatpush1.bf16.msra.mxu0 %v375
    %441 = vmatprep.subr.bf16.mxu0 %v378
    %442 = vmatpush1.bf16.msra.mxu0 %v377
    %443 = vmatprep.subr.bf16.mxu0 %v380
    %444 = vmatpush1.bf16.msra.mxu0 %v379
    %445 = vmatprep.subr.bf16.mxu0 %v382
    %446 = vmatpush1.bf16.msra.mxu0 %v381
    %447 = vmatprep.subr.bf16.mxu0 %v384
    %448 = vmatpush1.bf16.msra.mxu0 %v383
    %449 = vmatprep.subr.bf16.mxu0 %v386
    %450 = vmatpush1.bf16.msra.mxu0 %v385
    %451 = vmatprep.subr.bf16.mxu0 %v388
    %452 = vmatpush1.bf16.msra.mxu0 %v387
    %453 = vmatprep.subr.bf16.mxu0 %v390
    %454 = vmatpush1.bf16.msra.mxu0 %v389
    %455 = vmatprep.subr.bf16.mxu0 %v392
    %456 = vmatpush1.bf16.msra.mxu0 %v391
    %457 = vmatprep.subr.bf16.mxu0 %v394
    %458 = vmatpush1.bf16.msra.mxu0 %v393
    %459 = vmatprep.subr.bf16.mxu0 %v396
    %460 = vmatpush1.bf16.msra.mxu0 %v395
    %461 = vmatprep.subr.bf16.mxu0 %v398
    %462 = vmatpush1.bf16.msra.mxu0 %v397
    %463 = vmatprep.subr.bf16.mxu0 %v400
    %464 = vmatpush1.bf16.msra.mxu0 %v399
    %465 = vmatprep.subr.bf16.mxu0 %v402
    %466 = vmatpush1.bf16.msra.mxu0 %v401
    %467 = vmatprep.subr.bf16.mxu0 %v404
    %468 = vmatpush1.bf16.msra.mxu0 %v403
    %469 = vmatprep.subr.bf16.mxu0 %v406
    %470 = vmatpush1.bf16.msra.mxu0 %v405
    %471 = vmatprep.mubr.bf16.mxu0 %v234
    %472 = vmatmul.mubr.bf16.gmra.mrb[0].mxu0 %v233
    %v473 = vpop.f32.mrb[0].mxu0
    %v474 = vadd.f32 %v272, %v473
    %v475 = vpop.f32.mrb[0].mxu0
    %v476 = vadd.f32 %v276, %v475
    %v477 = vpop.f32.mrb[0].mxu0
    %v478 = vpop.f32.mrb[0].mxu0
    %479 = vdwg.mxu0
    %v480 = vmax.f32 %v474, 0.0
    %v481 = vmax.f32 %v476, 0.0
    %v482 = vpack.c.bf16 %v480, %v480
    %v483 = vpack.c.bf16 %v481, %v481
    %v484 = vld [vmem:[#allocation10] sm:$0xff]
    %v485 = vld [vmem:[#allocation10 + $0x8] sm:$0xf]
    %v486 = vld [vmem:[#allocation10 + $0xc] sm:$0xff]
    %v487 = vld [vmem:[#allocation10 + $0x14] sm:$0xf]
    %v488 = vld [vmem:[#allocation10 + $0x18] sm:$0xff]
    %v489 = vld [vmem:[#allocation10 + $0x20] sm:$0xf]
    %v490 = vld [vmem:[#allocation10 + $0x24] sm:$0xff]
    %v491 = vld [vmem:[#allocation10 + $0x2c] sm:$0xf]
    %v492 = vld [vmem:[#allocation10 + $0x30] sm:$0xff]
    %v493 = vld [vmem:[#allocation10 + $0x38] sm:$0xf]
    %v494 = vld [vmem:[#allocation10 + $0x3c] sm:$0xff]
    %v495 = vld [vmem:[#allocation10 + $0x44] sm:$0xf]
    %v496 = vld [vmem:[#allocation10 + $0x48] sm:$0xff]
    %v497 = vld [vmem:[#allocation10 + $0x50] sm:$0xf]
    %v498 = vld [vmem:[#allocation10 + $0x54] sm:$0xff]
    %v499 = vld [vmem:[#allocation10 + $0x5c] sm:$0xf]
    %v500 = vld [vmem:[#allocation10 + $0x60] sm:$0xff]
    %v501 = vld [vmem:[#allocation10 + $0x68] sm:$0xf]
    %v502 = vld [vmem:[#allocation10 + $0x6c] sm:$0xff]
    %v503 = vld [vmem:[#allocation10 + $0x74] sm:$0xf]
    %v504 = vld [vmem:[#allocation10 + $0x78] sm:$0xff]
    %v505 = vld [vmem:[#allocation10 + $0x80] sm:$0xf]
    %v506 = vld [vmem:[#allocation10 + $0x84] sm:$0xff]
    %v507 = vld [vmem:[#allocation10 + $0x8c] sm:$0xf]
    %v508 = vld [vmem:[#allocation10 + $0x90] sm:$0xff]
    %v509 = vld [vmem:[#allocation10 + $0x98] sm:$0xf]
    %v510 = vld [vmem:[#allocation10 + $0x9c] sm:$0xff]
    %v511 = vld [vmem:[#allocation10 + $0xa4] sm:$0xf]
    %v512 = vld [vmem:[#allocation10 + $0xa8] sm:$0xff]
    %v513 = vld [vmem:[#allocation10 + $0xb0] sm:$0xf]
    %v514 = vld [vmem:[#allocation10 + $0xb4] sm:$0xff]
    %v515 = vld [vmem:[#allocation10 + $0xbc] sm:$0xf]
    %v516 = vld [vmem:[#allocation10 + $0xc0] sm:$0xff]
    %v517 = vld [vmem:[#allocation10 + $0xc8] sm:$0xf]
    %v518 = vld [vmem:[#allocation10 + $0xcc] sm:$0xff]
    %v519 = vld [vmem:[#allocation10 + $0xd4] sm:$0xf]
    %v520 = vld [vmem:[#allocation10 + $0xd8] sm:$0xff]
    %v521 = vld [vmem:[#allocation10 + $0xe0] sm:$0xf]
    %v522 = vld [vmem:[#allocation10 + $0xe4] sm:$0xff]
    %v523 = vld [vmem:[#allocation10 + $0xec] sm:$0xf]
    %v524 = vld [vmem:[#allocation10 + $0xf0] sm:$0xff]
    %v525 = vld [vmem:[#allocation10 + $0xf8] sm:$0xf]
    %v526 = vld [vmem:[#allocation10 + $0xfc] sm:$0xff]
    %v527 = vld [vmem:[#allocation10 + $0x104] sm:$0xf]
    %v528 = vld [vmem:[#allocation10 + $0x108] sm:$0xff]
    %v529 = vld [vmem:[#allocation10 + $0x110] sm:$0xf]
    %v530 = vld [vmem:[#allocation10 + $0x114] sm:$0xff]
    %v531 = vld [vmem:[#allocation10 + $0x11c] sm:$0xf]
    %v532 = vld [vmem:[#allocation10 + $0x120] sm:$0xff]
    %v533 = vld [vmem:[#allocation10 + $0x128] sm:$0xf]
    %v534 = vld [vmem:[#allocation10 + $0x12c] sm:$0xff]
    %v535 = vld [vmem:[#allocation10 + $0x134] sm:$0xf]
    %v536 = vld [vmem:[#allocation10 + $0x138] sm:$0xff]
    %v537 = vld [vmem:[#allocation10 + $0x140] sm:$0xf]
    %v538 = vld [vmem:[#allocation10 + $0x144] sm:$0xff]
    %v539 = vld [vmem:[#allocation10 + $0x14c] sm:$0xf]
    %v540 = vld [vmem:[#allocation10 + $0x150] sm:$0xff]
    %v541 = vld [vmem:[#allocation10 + $0x158] sm:$0xf]
    %v542 = vld [vmem:[#allocation10 + $0x15c] sm:$0xff]
    %v543 = vld [vmem:[#allocation10 + $0x164] sm:$0xf]
    %v544 = vld [vmem:[#allocation10 + $0x168] sm:$0xff]
    %v545 = vld [vmem:[#allocation10 + $0x170] sm:$0xf]
    %v546 = vld [vmem:[#allocation10 + $0x174] sm:$0xff]
    %v547 = vld [vmem:[#allocation10 + $0x17c] sm:$0xf]
    %v548 = vld [vmem:[%s7] sm:$0x7]
    %v550 = vlaneseq
    %v551 = vshrl.u32 %v550, 7
    %v552 = vsub.s32 0, %v551
    %v553 = vrot.slane %v548, %v552
    %v554 = vlaneseq
    %v555 = vshrl.u32 %v554, 7
    %v556 = vsub.s32 1, %v555
    %v557 = vrot.slane %v548, %v556
    %v558 = vlaneseq
    %v559 = vshrl.u32 %v558, 7
    %v560 = vsub.s32 2, %v559
    %v561 = vrot.slane %v548, %v560
    %v629 = vunpack.c.l.b16 %v484
    %v630 = vunpack.c.h.b16 %v484
    %v631 = vunpack.c.l.b16 %v485
    %v632 = vunpack.c.l.b16 %v486
    %v633 = vunpack.c.h.b16 %v486
    %v634 = vunpack.c.l.b16 %v487
    %v635 = vunpack.c.l.b16 %v488
    %v636 = vunpack.c.h.b16 %v488
    %v637 = vunpack.c.l.b16 %v489
    %v638 = vunpack.c.l.b16 %v490
    %v639 = vunpack.c.h.b16 %v490
    %v640 = vunpack.c.l.b16 %v491
    %v641 = vunpack.c.l.b16 %v492
    %v642 = vunpack.c.h.b16 %v492
    %v643 = vunpack.c.l.b16 %v493
    %v644 = vunpack.c.l.b16 %v494
    %v645 = vunpack.c.h.b16 %v494
    %v646 = vunpack.c.l.b16 %v495
    %v647 = vunpack.c.l.b16 %v496
    %v648 = vunpack.c.h.b16 %v496
    %v649 = vunpack.c.l.b16 %v497
    %v650 = vunpack.c.l.b16 %v498
    %v651 = vunpack.c.h.b16 %v498
    %v652 = vunpack.c.l.b16 %v499
    %v653 = vunpack.c.l.b16 %v500
    %v654 = vunpack.c.h.b16 %v500
    %v655 = vunpack.c.l.b16 %v501
    %v656 = vunpack.c.l.b16 %v502
    %v657 = vunpack.c.h.b16 %v502
    %v658 = vunpack.c.l.b16 %v503
    %v659 = vunpack.c.l.b16 %v504
    %v660 = vunpack.c.h.b16 %v504
    %v661 = vunpack.c.l.b16 %v505
    %v662 = vunpack.c.l.b16 %v506
    %v663 = vunpack.c.h.b16 %v506
    %v664 = vunpack.c.l.b16 %v507
    %v665 = vunpack.c.l.b16 %v508
    %v666 = vunpack.c.h.b16 %v508
    %v667 = vunpack.c.l.b16 %v509
    %v668 = vunpack.c.l.b16 %v510
    %v669 = vunpack.c.h.b16 %v510
    %v670 = vunpack.c.l.b16 %v511
    %v671 = vunpack.c.l.b16 %v512
    %v672 = vunpack.c.h.b16 %v512
    %v673 = vunpack.c.l.b16 %v513
    %v674 = vunpack.c.l.b16 %v514
    %v675 = vunpack.c.h.b16 %v514
    %v676 = vunpack.c.l.b16 %v515
    %v677 = vunpack.c.l.b16 %v516
    %v678 = vunpack.c.h.b16 %v516
    %v679 = vunpack.c.l.b16 %v517
    %v680 = vunpack.c.l.b16 %v518
    %v681 = vunpack.c.h.b16 %v518
    %v682 = vunpack.c.l.b16 %v519
    %v683 = vunpack.c.l.b16 %v520
    %v684 = vunpack.c.h.b16 %v520
    %v685 = vunpack.c.l.b16 %v521
    %v686 = vunpack.c.l.b16 %v522
    %v687 = vunpack.c.h.b16 %v522
    %v688 = vunpack.c.l.b16 %v523
    %v689 = vunpack.c.l.b16 %v524
    %v690 = vunpack.c.h.b16 %v524
    %v691 = vunpack.c.l.b16 %v525
    %v692 = vunpack.c.l.b16 %v526
    %v693 = vunpack.c.h.b16 %v526
    %v694 = vunpack.c.l.b16 %v527
    %v695 = vunpack.c.l.b16 %v528
    %v696 = vunpack.c.h.b16 %v528
    %v697 = vunpack.c.l.b16 %v529
    %v698 = vunpack.c.l.b16 %v530
    %v699 = vunpack.c.h.b16 %v530
    %v700 = vunpack.c.l.b16 %v531
    %v701 = vunpack.c.l.b16 %v532
    %v702 = vunpack.c.h.b16 %v532
    %v703 = vunpack.c.l.b16 %v533
    %v704 = vunpack.c.l.b16 %v534
    %v705 = vunpack.c.h.b16 %v534
    %v706 = vunpack.c.l.b16 %v535
    %v707 = vunpack.c.l.b16 %v536
    %v708 = vunpack.c.h.b16 %v536
    %v709 = vunpack.c.l.b16 %v537
    %v710 = vunpack.c.l.b16 %v538
    %v711 = vunpack.c.h.b16 %v538
    %v712 = vunpack.c.l.b16 %v539
    %v713 = vunpack.c.l.b16 %v540
    %v714 = vunpack.c.h.b16 %v540
    %v715 = vunpack.c.l.b16 %v541
    %v716 = vunpack.c.l.b16 %v542
    %v717 = vunpack.c.h.b16 %v542
    %v718 = vunpack.c.l.b16 %v543
    %v719 = vunpack.c.l.b16 %v544
    %v720 = vunpack.c.h.b16 %v544
    %v721 = vunpack.c.l.b16 %v545
    %v722 = vunpack.c.l.b16 %v546
    %v723 = vunpack.c.h.b16 %v546
    %v724 = vunpack.c.l.b16 %v547
    %v725 = vpack.c.b16 %v632, %v629
    %v726 = vpack.c.b16 %v633, %v630
    %v727 = vpack.c.b16 %v634, %v631
    %v728 = vpack.c.b16 %v638, %v635
    %v729 = vpack.c.b16 %v639, %v636
    %v730 = vpack.c.b16 %v640, %v637
    %v731 = vpack.c.b16 %v644, %v641
    %v732 = vpack.c.b16 %v645, %v642
    %v733 = vpack.c.b16 %v646, %v643
    %v734 = vpack.c.b16 %v650, %v647
    %v735 = vpack.c.b16 %v651, %v648
    %v736 = vpack.c.b16 %v652, %v649
    %v737 = vpack.c.b16 %v656, %v653
    %v738 = vpack.c.b16 %v657, %v654
    %v739 = vpack.c.b16 %v658, %v655
    %v740 = vpack.c.b16 %v662, %v659
    %v741 = vpack.c.b16 %v663, %v660
    %v742 = vpack.c.b16 %v664, %v661
    %v743 = vpack.c.b16 %v668, %v665
    %v744 = vpack.c.b16 %v669, %v666
    %v745 = vpack.c.b16 %v670, %v667
    %v746 = vpack.c.b16 %v674, %v671
    %v747 = vpack.c.b16 %v675, %v672
    %v748 = vpack.c.b16 %v676, %v673
    %v749 = vpack.c.b16 %v680, %v677
    %v750 = vpack.c.b16 %v681, %v678
    %v751 = vpack.c.b16 %v682, %v679
    %v752 = vpack.c.b16 %v686, %v683
    %v753 = vpack.c.b16 %v687, %v684
    %v754 = vpack.c.b16 %v688, %v685
    %v755 = vpack.c.b16 %v692, %v689
    %v756 = vpack.c.b16 %v693, %v690
    %v757 = vpack.c.b16 %v694, %v691
    %v758 = vpack.c.b16 %v698, %v695
    %v759 = vpack.c.b16 %v699, %v696
    %v760 = vpack.c.b16 %v700, %v697
    %v761 = vpack.c.b16 %v704, %v701
    %v762 = vpack.c.b16 %v705, %v702
    %v763 = vpack.c.b16 %v706, %v703
    %v764 = vpack.c.b16 %v710, %v707
    %v765 = vpack.c.b16 %v711, %v708
    %v766 = vpack.c.b16 %v712, %v709
    %v767 = vpack.c.b16 %v716, %v713
    %v768 = vpack.c.b16 %v717, %v714
    %v769 = vpack.c.b16 %v718, %v715
    %v770 = vpack.c.b16 %v722, %v719
    %v771 = vpack.c.b16 %v723, %v720
    %v772 = vpack.c.b16 %v724, %v721
    %821 = vmatprep.subr.bf16.mxu0 %v726
    %822 = vmatpush1.bf16.msra.mxu0 %v725
    %823 = vmatprep.subr.bf16.mxu0 %v729
    %824 = vmatpush1.bf16.msra.mxu0 %v728
    %825 = vmatprep.subr.bf16.mxu0 %v732
    %826 = vmatpush1.bf16.msra.mxu0 %v731
    %827 = vmatprep.subr.bf16.mxu0 %v735
    %828 = vmatpush1.bf16.msra.mxu0 %v734
    %829 = vmatprep.subr.bf16.mxu0 %v738
    %830 = vmatpush1.bf16.msra.mxu0 %v737
    %831 = vmatprep.subr.bf16.mxu0 %v741
    %832 = vmatpush1.bf16.msra.mxu0 %v740
    %833 = vmatprep.subr.bf16.mxu0 %v744
    %834 = vmatpush1.bf16.msra.mxu0 %v743
    %835 = vmatprep.subr.bf16.mxu0 %v747
    %836 = vmatpush1.bf16.msra.mxu0 %v746
    %837 = vmatprep.subr.bf16.mxu0 %v750
    %838 = vmatpush1.bf16.msra.mxu0 %v749
    %839 = vmatprep.subr.bf16.mxu0 %v753
    %840 = vmatpush1.bf16.msra.mxu0 %v752
    %841 = vmatprep.subr.bf16.mxu0 %v756
    %842 = vmatpush1.bf16.msra.mxu0 %v755
    %843 = vmatprep.subr.bf16.mxu0 %v759
    %844 = vmatpush1.bf16.msra.mxu0 %v758
    %845 = vmatprep.subr.bf16.mxu0 %v762
    %846 = vmatpush1.bf16.msra.mxu0 %v761
    %847 = vmatprep.subr.bf16.mxu0 %v765
    %848 = vmatpush1.bf16.msra.mxu0 %v764
    %849 = vmatprep.subr.bf16.mxu0 %v768
    %850 = vmatpush1.bf16.msra.mxu0 %v767
    %851 = vmatprep.subr.bf16.mxu0 %v771
    %852 = vmatpush1.bf16.msra.mxu0 %v770
    %853 = vmatprep.mubr.bf16.mxu0 %v483
    %854 = vmatmul.mubr.bf16.gmra.mrb[0].mxu0 %v482
    %v855 = vpop.f32.mrb[0].mxu0
    %v856 = vadd.f32 %v553, %v855
    %v857 = vpop.f32.mrb[0].mxu0
    %v858 = vadd.f32 %v557, %v857
    %v859 = vpop.f32.mrb[0].mxu0
    %v860 = vpop.f32.mrb[0].mxu0
    %861 = vdwg.mxu0
    %862 = vmatprep.subr.bf16.mxu0 0
    %863 = vmatpush1.bf16.msra.mxu0 %v727
    %864 = vmatprep.subr.bf16.mxu0 0
    %865 = vmatpush1.bf16.msra.mxu0 %v730
    %866 = vmatprep.subr.bf16.mxu0 0
    %867 = vmatpush1.bf16.msra.mxu0 %v733
    %868 = vmatprep.subr.bf16.mxu0 0
    %869 = vmatpush1.bf16.msra.mxu0 %v736
    %870 = vmatprep.subr.bf16.mxu0 0
    %871 = vmatpush1.bf16.msra.mxu0 %v739
    %872 = vmatprep.subr.bf16.mxu0 0
    %873 = vmatpush1.bf16.msra.mxu0 %v742
    %874 = vmatprep.subr.bf16.mxu0 0
    %875 = vmatpush1.bf16.msra.mxu0 %v745
    %876 = vmatprep.subr.bf16.mxu0 0
    %877 = vmatpush1.bf16.msra.mxu0 %v748
    %878 = vmatprep.subr.bf16.mxu0 0
    %879 = vmatpush1.bf16.msra.mxu0 %v751
    %880 = vmatprep.subr.bf16.mxu0 0
    %881 = vmatpush1.bf16.msra.mxu0 %v754
    %882 = vmatprep.subr.bf16.mxu0 0
    %883 = vmatpush1.bf16.msra.mxu0 %v757
    %884 = vmatprep.subr.bf16.mxu0 0
    %885 = vmatpush1.bf16.msra.mxu0 %v760
    %886 = vmatprep.subr.bf16.mxu0 0
    %887 = vmatpush1.bf16.msra.mxu0 %v763
    %888 = vmatprep.subr.bf16.mxu0 0
    %889 = vmatpush1.bf16.msra.mxu0 %v766
    %890 = vmatprep.subr.bf16.mxu0 0
    %891 = vmatpush1.bf16.msra.mxu0 %v769
    %892 = vmatprep.subr.bf16.mxu0 0
    %893 = vmatpush1.bf16.msra.mxu0 %v772
    %894 = vmatprep.mubr.bf16.mxu0 %v483
    %895 = vmatmul.mubr.bf16.gmra.mrb[0].mxu0 %v482
    %v896 = vpop.f32.mrb[0].mxu0
    %v897 = vadd.f32 %v561, %v896
    %v898 = vpop.f32.mrb[0].mxu0
    %v899 = vpop.f32.mrb[0].mxu0
    %v900 = vpop.f32.mrb[0].mxu0
    %901 = vdwg.mxu0
    %v902 = vmax.f32 %v856, 0.0
    %v903 = vmax.f32 %v858, 0.0
    %v904 = vmax.f32 %v897, 0.0
    %v905 = vpack.c.bf16 %v903, %v903
    %v906 = vpack.c.bf16 %v904, %v904
    %v907 = vld [vmem:[#allocation12] sm:$0xf]
    %v908 = vld [vmem:[#allocation12 + $0x4] sm:$0xf]
    %v909 = vld [vmem:[#allocation12 + $0x8] sm:$0xf]
    %v910 = vld [vmem:[#allocation12 + $0xc] sm:$0xf]
    %v911 = vld [vmem:[#allocation12 + $0x10] sm:$0xf]
    %v912 = vld [vmem:[#allocation12 + $0x14] sm:$0xf]
    %v913 = vld [vmem:[#allocation12 + $0x18] sm:$0xf]
    %v914 = vld [vmem:[#allocation12 + $0x1c] sm:$0xf]
    %v915 = vld [vmem:[#allocation12 + $0x20] sm:$0xf]
    %v916 = vld [vmem:[#allocation12 + $0x24] sm:$0xf]
    %v917 = vld [vmem:[#allocation12 + $0x28] sm:$0xf]
    %v918 = vld [vmem:[#allocation12 + $0x2c] sm:$0xf]
    %v919 = vld [vmem:[#allocation12 + $0x30] sm:$0xf]
    %v920 = vld [vmem:[#allocation12 + $0x34] sm:$0xf]
    %v921 = vld [vmem:[#allocation12 + $0x38] sm:$0xf]
    %v922 = vld [vmem:[#allocation12 + $0x3c] sm:$0xf]
    %v923 = vld [vmem:[#allocation12 + $0x40] sm:$0xf]
    %v924 = vld [vmem:[#allocation12 + $0x44] sm:$0xf]
    %v925 = vld [vmem:[#allocation12 + $0x48] sm:$0xf]
    %v926 = vld [vmem:[#allocation12 + $0x4c] sm:$0xf]
    %v927 = vld [vmem:[#allocation12 + $0x50] sm:$0xf]
    %v928 = vld [vmem:[#allocation12 + $0x54] sm:$0xf]
    %v929 = vld [vmem:[#allocation12 + $0x58] sm:$0xf]
    %v930 = vld [vmem:[#allocation12 + $0x5c] sm:$0xf]
    %v931 = vld [vmem:[#allocation12 + $0x60] sm:$0xf]
    %v932 = vld [vmem:[#allocation12 + $0x64] sm:$0xf]
    %v933 = vld [vmem:[#allocation12 + $0x68] sm:$0xf]
    %v934 = vld [vmem:[#allocation12 + $0x6c] sm:$0xf]
    %v935 = vld [vmem:[#allocation12 + $0x70] sm:$0xf]
    %v936 = vld [vmem:[#allocation12 + $0x74] sm:$0xf]
    %v937 = vld [vmem:[#allocation12 + $0x78] sm:$0xf]
    %v938 = vld [vmem:[#allocation12 + $0x7c] sm:$0xf]
    %v939 = vld [vmem:[%s9] sm:$0x1]
    %v941 = vlaneseq
    %v942 = vshrl.u32 %v941, 7
    %v943 = vsub.s32 0, %v942
    %v944 = vrot.slane %v939, %v943
    %v978 = vunpack.c.l.b16 %v907
    %v979 = vunpack.c.l.b16 %v908
    %v980 = vunpack.c.l.b16 %v909
    %v981 = vunpack.c.l.b16 %v910
    %v982 = vunpack.c.l.b16 %v911
    %v983 = vunpack.c.l.b16 %v912
    %v984 = vunpack.c.l.b16 %v913
    %v985 = vunpack.c.l.b16 %v914
    %v986 = vunpack.c.l.b16 %v915
    %v987 = vunpack.c.l.b16 %v916
    %v988 = vunpack.c.l.b16 %v917
    %v989 = vunpack.c.l.b16 %v918
    %v990 = vunpack.c.l.b16 %v919
    %v991 = vunpack.c.l.b16 %v920
    %v992 = vunpack.c.l.b16 %v921
    %v993 = vunpack.c.l.b16 %v922
    %v994 = vunpack.c.l.b16 %v923
    %v995 = vunpack.c.l.b16 %v924
    %v996 = vunpack.c.l.b16 %v925
    %v997 = vunpack.c.l.b16 %v926
    %v998 = vunpack.c.l.b16 %v927
    %v999 = vunpack.c.l.b16 %v928
    %v1000 = vunpack.c.l.b16 %v929
    %v1001 = vunpack.c.l.b16 %v930
    %v1002 = vunpack.c.l.b16 %v931
    %v1003 = vunpack.c.l.b16 %v932
    %v1004 = vunpack.c.l.b16 %v933
    %v1005 = vunpack.c.l.b16 %v934
    %v1006 = vunpack.c.l.b16 %v935
    %v1007 = vunpack.c.l.b16 %v936
    %v1008 = vunpack.c.l.b16 %v937
    %v1009 = vunpack.c.l.b16 %v938
    %v1010 = vpack.c.b16 %v979, %v978
    %v1011 = vpack.c.b16 %v981, %v980
    %v1012 = vpack.c.b16 %v983, %v982
    %v1013 = vpack.c.b16 %v985, %v984
    %v1014 = vpack.c.b16 %v987, %v986
    %v1015 = vpack.c.b16 %v989, %v988
    %v1016 = vpack.c.b16 %v991, %v990
    %v1017 = vpack.c.b16 %v993, %v992
    %v1018 = vpack.c.b16 %v995, %v994
    %v1019 = vpack.c.b16 %v997, %v996
    %v1020 = vpack.c.b16 %v999, %v998
    %v1021 = vpack.c.b16 %v1001, %v1000
    %v1022 = vpack.c.b16 %v1003, %v1002
    %v1023 = vpack.c.b16 %v1005, %v1004
    %v1024 = vpack.c.b16 %v1007, %v1006
    %v1025 = vpack.c.b16 %v1009, %v1008
    %1042 = vmatprep.subr.bf16.mxu0 0
    %1043 = vmatpush1.bf16.msra.mxu0 %v1010
    %1044 = vmatprep.subr.bf16.mxu0 0
    %1045 = vmatpush1.bf16.msra.mxu0 %v1011
    %1046 = vmatprep.subr.bf16.mxu0 0
    %1047 = vmatpush1.bf16.msra.mxu0 %v1012
    %1048 = vmatprep.subr.bf16.mxu0 0
    %1049 = vmatpush1.bf16.msra.mxu0 %v1013
    %1050 = vmatprep.subr.bf16.mxu0 0
    %1051 = vmatpush1.bf16.msra.mxu0 %v1014
    %1052 = vmatprep.subr.bf16.mxu0 0
    %1053 = vmatpush1.bf16.msra.mxu0 %v1015
    %1054 = vmatprep.subr.bf16.mxu0 0
    %1055 = vmatpush1.bf16.msra.mxu0 %v1016
    %1056 = vmatprep.subr.bf16.mxu0 0
    %1057 = vmatpush1.bf16.msra.mxu0 %v1017
    %1058 = vmatprep.subr.bf16.mxu0 0
    %1059 = vmatpush1.bf16.msra.mxu0 %v1018
    %1060 = vmatprep.subr.bf16.mxu0 0
    %1061 = vmatpush1.bf16.msra.mxu0 %v1019
    %1062 = vmatprep.subr.bf16.mxu0 0
    %1063 = vmatpush1.bf16.msra.mxu0 %v1020
    %1064 = vmatprep.subr.bf16.mxu0 0
    %1065 = vmatpush1.bf16.msra.mxu0 %v1021
    %1066 = vmatprep.subr.bf16.mxu0 0
    %1067 = vmatpush1.bf16.msra.mxu0 %v1022
    %1068 = vmatprep.subr.bf16.mxu0 0
    %1069 = vmatpush1.bf16.msra.mxu0 %v1023
    %1070 = vmatprep.subr.bf16.mxu0 0
    %1071 = vmatpush1.bf16.msra.mxu0 %v1024
    %1072 = vmatprep.subr.bf16.mxu0 0
    %1073 = vmatpush1.bf16.msra.mxu0 %v1025
    %1074 = vmatprep.mubr.bf16.mxu0 %v906
    %1075 = vmatmul.mubr.bf16.gmra.mrb[0].mxu0 %v905
    %v1076 = vpop.f32.mrb[0].mxu0
    %v1077 = vadd.f32 %v944, %v1076
    %v1078 = vpop.f32.mrb[0].mxu0
    %v1079 = vpop.f32.mrb[0].mxu0
    %v1080 = vpop.f32.mrb[0].mxu0
    %1081 = vdwg.mxu0
    %v1082 = vmax.f32 %v1077, 0.0
    %v1083 = vpack.c.bf16 %v902, %v902
    %v1084 = vpack.c.bf16 %v1082, %v1082
    %v1085 = vld [vmem:[#allocation13] sm:$0xf]
    %v1086 = vld [vmem:[#allocation13 + $0x4] sm:$0xf]
    %v1087 = vld [vmem:[#allocation13 + $0x8] sm:$0xf]
    %v1088 = vld [vmem:[#allocation13 + $0xc] sm:$0xf]
    %v1089 = vld [vmem:[#allocation13 + $0x10] sm:$0xf]
    %v1090 = vld [vmem:[#allocation13 + $0x14] sm:$0xf]
    %v1091 = vld [vmem:[#allocation13 + $0x18] sm:$0xf]
    %v1092 = vld [vmem:[#allocation13 + $0x1c] sm:$0xf]
    %v1093 = vld [vmem:[#allocation13 + $0x20] sm:$0xf]
    %v1094 = vld [vmem:[#allocation13 + $0x24] sm:$0xf]
    %v1095 = vld [vmem:[#allocation13 + $0x28] sm:$0xf]
    %v1096 = vld [vmem:[#allocation13 + $0x2c] sm:$0xf]
    %v1097 = vld [vmem:[#allocation13 + $0x30] sm:$0xf]
    %v1098 = vld [vmem:[#allocation13 + $0x34] sm:$0xf]
    %v1099 = vld [vmem:[#allocation13 + $0x38] sm:$0xf]
    %v1100 = vld [vmem:[#allocation13 + $0x3c] sm:$0xf]
    %v1101 = vld [vmem:[#allocation13 + $0x40] sm:$0xf]
    %v1102 = vld [vmem:[#allocation13 + $0x44] sm:$0xf]
    %v1103 = vld [vmem:[#allocation13 + $0x48] sm:$0xf]
    %v1104 = vld [vmem:[#allocation13 + $0x4c] sm:$0xf]
    %v1105 = vld [vmem:[#allocation13 + $0x50] sm:$0xf]
    %v1106 = vld [vmem:[#allocation13 + $0x54] sm:$0xf]
    %v1107 = vld [vmem:[#allocation13 + $0x58] sm:$0xf]
    %v1108 = vld [vmem:[#allocation13 + $0x5c] sm:$0xf]
    %v1109 = vld [vmem:[#allocation13 + $0x60] sm:$0xf]
    %v1110 = vld [vmem:[#allocation13 + $0x64] sm:$0xf]
    %v1111 = vld [vmem:[#allocation13 + $0x68] sm:$0xf]
    %v1112 = vld [vmem:[#allocation13 + $0x6c] sm:$0xf]
    %v1113 = vld [vmem:[#allocation13 + $0x70] sm:$0xf]
    %v1114 = vld [vmem:[#allocation13 + $0x74] sm:$0xf]
    %v1115 = vld [vmem:[#allocation13 + $0x78] sm:$0xf]
    %v1116 = vld [vmem:[#allocation13 + $0x7c] sm:$0xf]
    %v1117 = vld [vmem:[%s11] sm:$0x1]
    %v1119 = vlaneseq
    %v1120 = vshrl.u32 %v1119, 7
    %v1121 = vsub.s32 0, %v1120
    %v1122 = vrot.slane %v1117, %v1121
    %v1156 = vunpack.c.l.b16 %v1085
    %v1157 = vunpack.c.l.b16 %v1086
    %v1158 = vunpack.c.l.b16 %v1087
    %v1159 = vunpack.c.l.b16 %v1088
    %v1160 = vunpack.c.l.b16 %v1089
    %v1161 = vunpack.c.l.b16 %v1090
    %v1162 = vunpack.c.l.b16 %v1091
    %v1163 = vunpack.c.l.b16 %v1092
    %v1164 = vunpack.c.l.b16 %v1093
    %v1165 = vunpack.c.l.b16 %v1094
    %v1166 = vunpack.c.l.b16 %v1095
    %v1167 = vunpack.c.l.b16 %v1096
    %v1168 = vunpack.c.l.b16 %v1097
    %v1169 = vunpack.c.l.b16 %v1098
    %v1170 = vunpack.c.l.b16 %v1099
    %v1171 = vunpack.c.l.b16 %v1100
    %v1172 = vunpack.c.l.b16 %v1101
    %v1173 = vunpack.c.l.b16 %v1102
    %v1174 = vunpack.c.l.b16 %v1103
    %v1175 = vunpack.c.l.b16 %v1104
    %v1176 = vunpack.c.l.b16 %v1105
    %v1177 = vunpack.c.l.b16 %v1106
    %v1178 = vunpack.c.l.b16 %v1107
    %v1179 = vunpack.c.l.b16 %v1108
    %v1180 = vunpack.c.l.b16 %v1109
    %v1181 = vunpack.c.l.b16 %v1110
    %v1182 = vunpack.c.l.b16 %v1111
    %v1183 = vunpack.c.l.b16 %v1112
    %v1184 = vunpack.c.l.b16 %v1113
    %v1185 = vunpack.c.l.b16 %v1114
    %v1186 = vunpack.c.l.b16 %v1115
    %v1187 = vunpack.c.l.b16 %v1116
    %v1188 = vpack.c.b16 %v1157, %v1156
    %v1189 = vpack.c.b16 %v1159, %v1158
    %v1190 = vpack.c.b16 %v1161, %v1160
    %v1191 = vpack.c.b16 %v1163, %v1162
    %v1192 = vpack.c.b16 %v1165, %v1164
    %v1193 = vpack.c.b16 %v1167, %v1166
    %v1194 = vpack.c.b16 %v1169, %v1168
    %v1195 = vpack.c.b16 %v1171, %v1170
    %v1196 = vpack.c.b16 %v1173, %v1172
    %v1197 = vpack.c.b16 %v1175, %v1174
    %v1198 = vpack.c.b16 %v1177, %v1176
    %v1199 = vpack.c.b16 %v1179, %v1178
    %v1200 = vpack.c.b16 %v1181, %v1180
    %v1201 = vpack.c.b16 %v1183, %v1182
    %v1202 = vpack.c.b16 %v1185, %v1184
    %v1203 = vpack.c.b16 %v1187, %v1186
    %1220 = vmatprep.subr.bf16.mxu0 0
    %1221 = vmatpush1.bf16.msra.mxu0 %v1188
    %1222 = vmatprep.subr.bf16.mxu0 0
    %1223 = vmatpush1.bf16.msra.mxu0 %v1189
    %1224 = vmatprep.subr.bf16.mxu0 0
    %1225 = vmatpush1.bf16.msra.mxu0 %v1190
    %1226 = vmatprep.subr.bf16.mxu0 0
    %1227 = vmatpush1.bf16.msra.mxu0 %v1191
    %1228 = vmatprep.subr.bf16.mxu0 0
    %1229 = vmatpush1.bf16.msra.mxu0 %v1192
    %1230 = vmatprep.subr.bf16.mxu0 0
    %1231 = vmatpush1.bf16.msra.mxu0 %v1193
    %1232 = vmatprep.subr.bf16.mxu0 0
    %1233 = vmatpush1.bf16.msra.mxu0 %v1194
    %1234 = vmatprep.subr.bf16.mxu0 0
    %1235 = vmatpush1.bf16.msra.mxu0 %v1195
    %1236 = vmatprep.subr.bf16.mxu0 0
    %1237 = vmatpush1.bf16.msra.mxu0 %v1196
    %1238 = vmatprep.subr.bf16.mxu0 0
    %1239 = vmatpush1.bf16.msra.mxu0 %v1197
    %1240 = vmatprep.subr.bf16.mxu0 0
    %1241 = vmatpush1.bf16.msra.mxu0 %v1198
    %1242 = vmatprep.subr.bf16.mxu0 0
    %1243 = vmatpush1.bf16.msra.mxu0 %v1199
    %1244 = vmatprep.subr.bf16.mxu0 0
    %1245 = vmatpush1.bf16.msra.mxu0 %v1200
    %1246 = vmatprep.subr.bf16.mxu0 0
    %1247 = vmatpush1.bf16.msra.mxu0 %v1201
    %1248 = vmatprep.subr.bf16.mxu0 0
    %1249 = vmatpush1.bf16.msra.mxu0 %v1202
    %1250 = vmatprep.subr.bf16.mxu0 0
    %1251 = vmatpush1.bf16.msra.mxu0 %v1203
    %1252 = vmatprep.mubr.bf16.mxu0 %v1084
    %1253 = vmatmul.mubr.bf16.gmra.mrb[0].mxu0 %v1083
    %v1254 = vpop.f32.mrb[0].mxu0
    %v1255 = vadd.f32 %v1122, %v1254
    %v1256 = vpop.f32.mrb[0].mxu0
    %v1257 = vpop.f32.mrb[0].mxu0
    %v1258 = vpop.f32.mrb[0].mxu0
    %1259 = vdwg.mxu0
    %v1260 = vmul.f32 %v1255, %v144
    %v1261 = vadd.f32 %v1260, %v147
    %1262 = vst [vmem:[#allocation15] sm:$0xff] %v1261
    // Predicated region
    $region70: #{tpu_custom_call.1} parent=1 // pred_check
      _
    $region71: #{tpu_custom_call.1} parent=1 // pred_check_branch
      %1264 = sbr.rel (0) target = $region73
    $region72: #{tpu_custom_call.1} parent=1 // pred_region
      %s1266 = ssub.s32 128, 128
      %1267 = vsyncadd [#allocation6], %s1266
      %s1269 = sshll.u32 [#allocation15], 4
      %s1270 = int_to_ptr.vmem [resolvable:$true] %s1269
      %1272 = dma.vmem_to_hbm [thread:$0]  %s1270, 128, %s12, [#allocation6]
    $region73: #{tpu_custom_call.1} parent=1 // pred_fallthru
      _
    // Predicated region
    $region74: #{tpu_custom_call.1} parent=1 // pred_check
      _
    $region75: #{tpu_custom_call.1} parent=1 // pred_check_branch
      %1274 = sbr.rel (0) target = $region77
    $region76: #{tpu_custom_call.1} parent=1 // pred_region
      %1275 = dma.done [#allocation6], 128
    $region77: #{tpu_custom_call.1} parent=1 // pred_fallthru
      _
    %1276 = vsyncpa [#allocation5], 1
    %1277 = vsyncpa [#allocation8], 1
    %1278 = vsyncpa [#allocation11], 1
    %1279 = vsyncpa [#allocation14], 1
    %1280 = vsyncpa [#allocation6], 1

</llo_original>
